<compile_context>
chip_gen: v7x
topology: tpu7x:2x2x1
jax: 0.10.0
libtpu: 0.0.40
codegen_flags: <defaults>
</compile_context>

<pallas_src>
import functools
import math

import jax
import jax.numpy as jnp
from jax.experimental import pallas as pl
from jax.experimental.pallas import tpu as pltpu


def _dwconv5x5_s2_elu_kernel(main_ref, halo_ref, w_ref, o_ref, *, compute_dtype):
    """One (batch, channel, row-tile) step of the depthwise 5x5 / stride-2 conv + ELU.

    main_ref : (4, Th, Wop)  VMEM -- parity planes, rows [t*Th, t*Th + Th)
    halo_ref : (4, 8,  Wop)  VMEM -- parity planes, rows [t*Th + Th, t*Th + Th + 8) (2 used)
    w_ref    : (C, 25)       SMEM -- flattened per-channel 5x5 weights
    o_ref    : (Th, Wo_p)    VMEM -- lane-dense output tile for this channel
    """
    th, wo_p = o_ref.shape
    c = pl.program_id(1)

    # (Th+2, Wop) window per parity plane: main rows + the first 2 halo rows.
    win = []
    for p in range(4):
        wm = main_ref[p].astype(compute_dtype)
        wh = halo_ref[p, 0:2, :].astype(compute_dtype)
        win.append(jnp.concatenate([wm, wh], axis=0))

    # Hoisted lane (column) shifts: 10 distinct (row-parity, col-parity, col-offset) slabs.
    slabs = {}
    for rp in range(2):
        for cp in range(2):
            plane = win[2 * rp + cp]
            for co in range(3 if cp == 0 else 2):
                slabs[(rp, cp, co)] = plane[:, co:co + wo_p]

    # Accumulate per kernel-row offset (ro = ki // 2) at full window height; the sublane
    # alignment is applied once per group below (3 slices instead of 25 per-tap slices).
    group_sums = []
    for ro in range(3):
        acc = jnp.zeros((th + 2, wo_p), jnp.float32)
        for rp in range(2):
            ki = 2 * ro + rp
            if ki > 4:
                continue
            for kj in range(5):
                cp, co = kj % 2, kj // 2
                wv = w_ref[c, ki * 5 + kj].astype(compute_dtype)  # cheap SMEM scalar read
                acc = acc + wv * slabs[(rp, cp, co)]
        group_sums.append(acc)

    out = (group_sums[0][0:th, :]
           + group_sums[1][1:th + 1, :]
           + group_sums[2][2:th + 2, :])

    # ELU (alpha = 1).  Clamp before exp so large positives never reach the EUP.
    y = jnp.where(out > 0, out, jnp.exp(jnp.minimum(out, 0.0)) - 1.0)
    o_ref[...] = y.astype(o_ref.dtype)


def _round_up(x, m):
    return ((x + m - 1) // m) * m


def _depthwise_conv5x5_s2_elu(x, weight, *, row_tile=128, compute_dtype=jnp.float32):
    """x: (N, C, H, W), weight: (C, 1, 5, 5)  ->  (N, C, H//2, W//2)."""
    N, C, H, W = x.shape
    assert weight.shape == (C, 1, 5, 5)
    assert H % 2 == 0 and W % 2 == 0, (
        "stride-2 parity split assumes even H, W (odd sizes change the output grid)")
    Ho, Wo = H // 2, W // 2

    # Lane-dense output: pad the output width to a multiple of 128 (unmasked vst).
    Wo_p = _round_up(Wo, 128)
    # Row tile: multiple of 8, at most `row_tile`, chosen to minimise padded rows.
    n_tiles = max(1, -(-Ho // row_tile))
    Th = _round_up(-(-Ho // n_tiles), 8)
    Ho_p = n_tiles * Th

    Wop = Wo_p + 2   # parity-plane width: +2 cols for the column taps
    Hop = Ho_p + 8   # parity-plane height: 2 halo rows used + 6 rows of alignment slack
                     # so the 8-row halo window of the last tile stays in bounds.

    # Zero-pad so the parity planes are exactly (Hop, Wop):
    #   rows: 2 on top (PyTorch padding=2), bottom filled up to 2*Hop,
    #   cols: 2 on the left,                right  filled up to 2*Wop.
    xp = jnp.pad(x, ((0, 0), (0, 0), (2, 2 * Hop - 2 - H), (2, 2 * Wop - 2 - W)))
    planes = jnp.stack(
        [
            xp[:, :, 0::2, 0::2],   # even rows, even cols
            xp[:, :, 0::2, 1::2],   # even rows, odd  cols
            xp[:, :, 1::2, 0::2],   # odd  rows, even cols
            xp[:, :, 1::2, 1::2],   # odd  rows, odd  cols
        ],
        axis=2,
    )  # (N, C, 4, Hop, Wop)

    w_flat = weight.reshape(C, 25).astype(jnp.float32)

    # Generation-aware VMEM budget: double-buffered I/O blocks + in-kernel temporaries.
    in_bytes = x.dtype.itemsize
    ct_bytes = 4  # accumulators / temporaries counted at f32 width (upper bound)
    main_block = 4 * Th * Wop * in_bytes
    halo_block = 4 * 8 * Wop * in_bytes
    out_block = Th * Wo_p * in_bytes
    temps = (4 * (Th + 2) * Wop + 13 * (Th + 2) * Wo_p + Th * Wo_p) * ct_bytes
    need = 2 * (main_block + halo_block + out_block) + temps + (4 << 20)
    try:
        vmem_cap = pltpu.get_tpu_info().vmem_capacity_bytes
    except Exception:                 # pragma: no cover - fall back to smallest per-TC VMEM
        vmem_cap = 64 << 20
    vmem_limit = int(min(max(need, 16 << 20), int(vmem_cap * 0.85)))

    kernel = functools.partial(_dwconv5x5_s2_elu_kernel, compute_dtype=compute_dtype)
    out = pl.pallas_call(
        kernel,
        out_shape=jax.ShapeDtypeStruct((N, C, Ho_p, Wo_p), x.dtype),
        grid=(N, C, n_tiles),
        in_specs=[
            # Main row tile of the parity planes: rows [t*Th, t*Th + Th).
            pl.BlockSpec((None, None, 4, Th, Wop),
                         lambda n, c, t: (n, c, 0, t, 0)),
            # Halo window: 8 aligned rows starting at t*Th + Th (only the first 2 used).
            pl.BlockSpec((None, None, 4, 8, Wop),
                         lambda n, c, t: (n, c, 0, (t + 1) * (Th // 8), 0)),
            # Full (C, 25) weight table in SMEM; indexed with pl.program_id(1).
            pl.BlockSpec(memory_space=pltpu.MemorySpace.SMEM),
        ],
        out_specs=pl.BlockSpec((None, None, Th, Wo_p),
                               lambda n, c, t: (n, c, t, 0)),
        compiler_params=pltpu.CompilerParams(
            dimension_semantics=("parallel", "parallel", "parallel"),
            allow_input_fusion=[True, True, False],
            vmem_limit_bytes=vmem_limit,
        ),
    )(planes, planes, w_flat)

    return out[:, :, :Ho, :Wo]


def clc_pyramid_sample_forward(x, weights, is_downsample=True, level=1):
    """Forward pass of clc_Pyramid_Sample (downsample branch).

    weights: list of `level` arrays, each (3, 1, 5, 5).
    """
    if not is_downsample:
        # TODO(synk): ConvTranspose2d (upsample branch) not implemented as a Pallas kernel.
        raise NotImplementedError("Only the downsample branch is implemented.")
    y = x
    for k in range(level):
        y = _depthwise_conv5x5_s2_elu(y, weights[k])
    return y


def _init_weights(level=1, seed=0):
    """Match the PyTorch init: normal(0, sqrt(2 / (kh*kw*out_channels)))."""
    n = 5 * 5 * 3
    std = math.sqrt(2.0 / n)
    key = jax.random.PRNGKey(seed)
    ws = []
    for _ in range(level):
        key, sub = jax.random.split(key)
        ws.append(std * jax.random.normal(sub, (3, 1, 5, 5), dtype=jnp.float32))
    return ws


if __name__ == "__main__":
    key = jax.random.PRNGKey(0)
    x = jax.random.normal(key, (2, 3, 16, 16), dtype=jnp.float32)

    weights = _init_weights(level=1, seed=0)

    y = clc_pyramid_sample_forward(x, weights, is_downsample=True, level=1)
    y = jax.block_until_ready(y)

    # Reference check against XLA's grouped conv + ELU.
    ref = jax.lax.conv_general_dilated(
        x,
        weights[0],
        window_strides=(2, 2),
        padding=((2, 2), (2, 2)),
        dimension_numbers=("NCHW", "OIHW", "NCHW"),
        feature_group_count=3,
    )
    ref = jnp.where(ref > 0, ref, jnp.exp(jnp.minimum(ref, 0.0)) - 1.0)

    assert y.shape == (2, 3, 8, 8)
    assert jnp.allclose(y, ref, atol=1e-5, rtol=1e-5)

    print("KERNEL_OK")
</pallas_src>

<mosaic_0001>
module attributes {stable_mosaic.version = 11 : i64} {
  func.func @_dwconv5x5_s2_elu_kernel(%arg0: i32, %arg1: i32, %arg2: i32, %arg3: memref<1x1x4x8x130xf32, #tpu.memory_space<vmem>>, %arg4: memref<1x1x4x8x130xf32, #tpu.memory_space<vmem>>, %arg5: memref<3x25xf32, #tpu.memory_space<smem>>, %arg6: memref<1x1x8x128xf32, #tpu.memory_space<vmem>>) attributes {dimension_semantics = [#tpu.dimension_semantics<parallel>, #tpu.dimension_semantics<parallel>, #tpu.dimension_semantics<parallel>], iteration_bounds = array<i64: 2, 3, 1>, scalar_prefetch = 0 : i64, scratch_operands = 0 : i64, tpu.core_type = #tpu.core_type<tc>, window_params = [{transform_indices = @transform_0, window_bounds = array<i64: 1, 1, 4, 8, 130>}, {transform_indices = @transform_1, window_bounds = array<i64: 1, 1, 4, 8, 130>}, {transform_indices = @transform_2, window_bounds = array<i64: 3, 25>}, {transform_indices = @transform_3, window_bounds = array<i64: 1, 1, 8, 128>}]} {
    %c0 = arith.constant 0 : index
    %c0_0 = arith.constant 0 : index
    %c0_1 = arith.constant 0 : index
    %c0_2 = arith.constant 0 : index
    %c0_3 = arith.constant 0 : index
    %0 = vector.load %arg3[%c0, %c0_0, %c0_1, %c0_2, %c0_3] : memref<1x1x4x8x130xf32, #tpu.memory_space<vmem>>, vector<1x1x1x8x130xf32>
    %1 = vector.shape_cast %0 : vector<1x1x1x8x130xf32> to vector<8x130xf32>
    %c0_4 = arith.constant 0 : index
    %c0_5 = arith.constant 0 : index
    %c0_6 = arith.constant 0 : index
    %c0_7 = arith.constant 0 : index
    %c0_8 = arith.constant 0 : index
    %2 = vector.load %arg4[%c0_4, %c0_5, %c0_6, %c0_7, %c0_8] : memref<1x1x4x8x130xf32, #tpu.memory_space<vmem>>, vector<1x1x1x2x130xf32>
    %3 = vector.shape_cast %2 : vector<1x1x1x2x130xf32> to vector<2x130xf32>
    %4 = tpu.concatenate %1, %3 in 0 : vector<8x130xf32>, vector<2x130xf32> -> vector<10x130xf32>
    %c0_9 = arith.constant 0 : index
    %c0_10 = arith.constant 0 : index
    %c1 = arith.constant 1 : index
    %c0_11 = arith.constant 0 : index
    %c0_12 = arith.constant 0 : index
    %5 = vector.load %arg3[%c0_9, %c0_10, %c1, %c0_11, %c0_12] : memref<1x1x4x8x130xf32, #tpu.memory_space<vmem>>, vector<1x1x1x8x130xf32>
    %6 = vector.shape_cast %5 : vector<1x1x1x8x130xf32> to vector<8x130xf32>
    %c0_13 = arith.constant 0 : index
    %c0_14 = arith.constant 0 : index
    %c1_15 = arith.constant 1 : index
    %c0_16 = arith.constant 0 : index
    %c0_17 = arith.constant 0 : index
    %7 = vector.load %arg4[%c0_13, %c0_14, %c1_15, %c0_16, %c0_17] : memref<1x1x4x8x130xf32, #tpu.memory_space<vmem>>, vector<1x1x1x2x130xf32>
    %8 = vector.shape_cast %7 : vector<1x1x1x2x130xf32> to vector<2x130xf32>
    %9 = tpu.concatenate %6, %8 in 0 : vector<8x130xf32>, vector<2x130xf32> -> vector<10x130xf32>
    %c0_18 = arith.constant 0 : index
    %c0_19 = arith.constant 0 : index
    %c2 = arith.constant 2 : index
    %c0_20 = arith.constant 0 : index
    %c0_21 = arith.constant 0 : index
    %10 = vector.load %arg3[%c0_18, %c0_19, %c2, %c0_20, %c0_21] : memref<1x1x4x8x130xf32, #tpu.memory_space<vmem>>, vector<1x1x1x8x130xf32>
    %11 = vector.shape_cast %10 : vector<1x1x1x8x130xf32> to vector<8x130xf32>
    %c0_22 = arith.constant 0 : index
    %c0_23 = arith.constant 0 : index
    %c2_24 = arith.constant 2 : index
    %c0_25 = arith.constant 0 : index
    %c0_26 = arith.constant 0 : index
    %12 = vector.load %arg4[%c0_22, %c0_23, %c2_24, %c0_25, %c0_26] : memref<1x1x4x8x130xf32, #tpu.memory_space<vmem>>, vector<1x1x1x2x130xf32>
    %13 = vector.shape_cast %12 : vector<1x1x1x2x130xf32> to vector<2x130xf32>
    %14 = tpu.concatenate %11, %13 in 0 : vector<8x130xf32>, vector<2x130xf32> -> vector<10x130xf32>
    %c0_27 = arith.constant 0 : index
    %c0_28 = arith.constant 0 : index
    %c3 = arith.constant 3 : index
    %c0_29 = arith.constant 0 : index
    %c0_30 = arith.constant 0 : index
    %15 = vector.load %arg3[%c0_27, %c0_28, %c3, %c0_29, %c0_30] : memref<1x1x4x8x130xf32, #tpu.memory_space<vmem>>, vector<1x1x1x8x130xf32>
    %16 = vector.shape_cast %15 : vector<1x1x1x8x130xf32> to vector<8x130xf32>
    %c0_31 = arith.constant 0 : index
    %c0_32 = arith.constant 0 : index
    %c3_33 = arith.constant 3 : index
    %c0_34 = arith.constant 0 : index
    %c0_35 = arith.constant 0 : index
    %17 = vector.load %arg4[%c0_31, %c0_32, %c3_33, %c0_34, %c0_35] : memref<1x1x4x8x130xf32, #tpu.memory_space<vmem>>, vector<1x1x1x2x130xf32>
    %18 = vector.shape_cast %17 : vector<1x1x1x2x130xf32> to vector<2x130xf32>
    %19 = tpu.concatenate %16, %18 in 0 : vector<8x130xf32>, vector<2x130xf32> -> vector<10x130xf32>
    %20 = vector.extract_strided_slice %4 {offsets = [0, 0], sizes = [10, 128], strides = [1, 1]} : vector<10x130xf32> to vector<10x128xf32>
    %21 = vector.extract_strided_slice %4 {offsets = [0, 1], sizes = [10, 128], strides = [1, 1]} : vector<10x130xf32> to vector<10x128xf32>
    %22 = vector.extract_strided_slice %4 {offsets = [0, 2], sizes = [10, 128], strides = [1, 1]} : vector<10x130xf32> to vector<10x128xf32>
    %23 = vector.extract_strided_slice %9 {offsets = [0, 0], sizes = [10, 128], strides = [1, 1]} : vector<10x130xf32> to vector<10x128xf32>
    %24 = vector.extract_strided_slice %9 {offsets = [0, 1], sizes = [10, 128], strides = [1, 1]} : vector<10x130xf32> to vector<10x128xf32>
    %25 = vector.extract_strided_slice %14 {offsets = [0, 0], sizes = [10, 128], strides = [1, 1]} : vector<10x130xf32> to vector<10x128xf32>
    %26 = vector.extract_strided_slice %14 {offsets = [0, 1], sizes = [10, 128], strides = [1, 1]} : vector<10x130xf32> to vector<10x128xf32>
    %27 = vector.extract_strided_slice %14 {offsets = [0, 2], sizes = [10, 128], strides = [1, 1]} : vector<10x130xf32> to vector<10x128xf32>
    %28 = vector.extract_strided_slice %19 {offsets = [0, 0], sizes = [10, 128], strides = [1, 1]} : vector<10x130xf32> to vector<10x128xf32>
    %29 = vector.extract_strided_slice %19 {offsets = [0, 1], sizes = [10, 128], strides = [1, 1]} : vector<10x130xf32> to vector<10x128xf32>
    %cst = arith.constant 0.000000e+00 : f32
    %30 = vector.broadcast %cst : f32 to vector<10x128xf32>
    %31 = arith.index_cast %arg1 : i32 to index
    %c0_36 = arith.constant 0 : index
    %32 = memref.load %arg5[%31, %c0_36] : memref<3x25xf32, #tpu.memory_space<smem>>
    %33 = vector.broadcast %32 : f32 to vector<10x128xf32>
    %34 = arith.mulf %33, %20 : vector<10x128xf32>
    %35 = arith.addf %30, %34 : vector<10x128xf32>
    %36 = arith.index_cast %arg1 : i32 to index
    %c1_37 = arith.constant 1 : index
    %37 = memref.load %arg5[%36, %c1_37] : memref<3x25xf32, #tpu.memory_space<smem>>
    %38 = vector.broadcast %37 : f32 to vector<10x128xf32>
    %39 = arith.mulf %38, %23 : vector<10x128xf32>
    %40 = arith.addf %35, %39 : vector<10x128xf32>
    %41 = arith.index_cast %arg1 : i32 to index
    %c2_38 = arith.constant 2 : index
    %42 = memref.load %arg5[%41, %c2_38] : memref<3x25xf32, #tpu.memory_space<smem>>
    %43 = vector.broadcast %42 : f32 to vector<10x128xf32>
    %44 = arith.mulf %43, %21 : vector<10x128xf32>
    %45 = arith.addf %40, %44 : vector<10x128xf32>
    %46 = arith.index_cast %arg1 : i32 to index
    %c3_39 = arith.constant 3 : index
    %47 = memref.load %arg5[%46, %c3_39] : memref<3x25xf32, #tpu.memory_space<smem>>
    %48 = vector.broadcast %47 : f32 to vector<10x128xf32>
    %49 = arith.mulf %48, %24 : vector<10x128xf32>
    %50 = arith.addf %45, %49 : vector<10x128xf32>
    %51 = arith.index_cast %arg1 : i32 to index
    %c4 = arith.constant 4 : index
    %52 = memref.load %arg5[%51, %c4] : memref<3x25xf32, #tpu.memory_space<smem>>
    %53 = vector.broadcast %52 : f32 to vector<10x128xf32>
    %54 = arith.mulf %53, %22 : vector<10x128xf32>
    %55 = arith.addf %50, %54 : vector<10x128xf32>
    %56 = arith.index_cast %arg1 : i32 to index
    %c5 = arith.constant 5 : index
    %57 = memref.load %arg5[%56, %c5] : memref<3x25xf32, #tpu.memory_space<smem>>
    %58 = vector.broadcast %57 : f32 to vector<10x128xf32>
    %59 = arith.mulf %58, %25 : vector<10x128xf32>
    %60 = arith.addf %55, %59 : vector<10x128xf32>
    %61 = arith.index_cast %arg1 : i32 to index
    %c6 = arith.constant 6 : index
    %62 = memref.load %arg5[%61, %c6] : memref<3x25xf32, #tpu.memory_space<smem>>
    %63 = vector.broadcast %62 : f32 to vector<10x128xf32>
    %64 = arith.mulf %63, %28 : vector<10x128xf32>
    %65 = arith.addf %60, %64 : vector<10x128xf32>
    %66 = arith.index_cast %arg1 : i32 to index
    %c7 = arith.constant 7 : index
    %67 = memref.load %arg5[%66, %c7] : memref<3x25xf32, #tpu.memory_space<smem>>
    %68 = vector.broadcast %67 : f32 to vector<10x128xf32>
    %69 = arith.mulf %68, %26 : vector<10x128xf32>
    %70 = arith.addf %65, %69 : vector<10x128xf32>
    %71 = arith.index_cast %arg1 : i32 to index
    %c8 = arith.constant 8 : index
    %72 = memref.load %arg5[%71, %c8] : memref<3x25xf32, #tpu.memory_space<smem>>
    %73 = vector.broadcast %72 : f32 to vector<10x128xf32>
    %74 = arith.mulf %73, %29 : vector<10x128xf32>
    %75 = arith.addf %70, %74 : vector<10x128xf32>
    %76 = arith.index_cast %arg1 : i32 to index
    %c9 = arith.constant 9 : index
    %77 = memref.load %arg5[%76, %c9] : memref<3x25xf32, #tpu.memory_space<smem>>
    %78 = vector.broadcast %77 : f32 to vector<10x128xf32>
    %79 = arith.mulf %78, %27 : vector<10x128xf32>
    %80 = arith.addf %75, %79 : vector<10x128xf32>
    %cst_40 = arith.constant 0.000000e+00 : f32
    %81 = vector.broadcast %cst_40 : f32 to vector<10x128xf32>
    %82 = arith.index_cast %arg1 : i32 to index
    %c10 = arith.constant 10 : index
    %83 = memref.load %arg5[%82, %c10] : memref<3x25xf32, #tpu.memory_space<smem>>
    %84 = vector.broadcast %83 : f32 to vector<10x128xf32>
    %85 = arith.mulf %84, %20 : vector<10x128xf32>
    %86 = arith.addf %81, %85 : vector<10x128xf32>
    %87 = arith.index_cast %arg1 : i32 to index
    %c11 = arith.constant 11 : index
    %88 = memref.load %arg5[%87, %c11] : memref<3x25xf32, #tpu.memory_space<smem>>
    %89 = vector.broadcast %88 : f32 to vector<10x128xf32>
    %90 = arith.mulf %89, %23 : vector<10x128xf32>
    %91 = arith.addf %86, %90 : vector<10x128xf32>
    %92 = arith.index_cast %arg1 : i32 to index
    %c12 = arith.constant 12 : index
    %93 = memref.load %arg5[%92, %c12] : memref<3x25xf32, #tpu.memory_space<smem>>
    %94 = vector.broadcast %93 : f32 to vector<10x128xf32>
    %95 = arith.mulf %94, %21 : vector<10x128xf32>
    %96 = arith.addf %91, %95 : vector<10x128xf32>
    %97 = arith.index_cast %arg1 : i32 to index
    %c13 = arith.constant 13 : index
    %98 = memref.load %arg5[%97, %c13] : memref<3x25xf32, #tpu.memory_space<smem>>
    %99 = vector.broadcast %98 : f32 to vector<10x128xf32>
    %100 = arith.mulf %99, %24 : vector<10x128xf32>
    %101 = arith.addf %96, %100 : vector<10x128xf32>
    %102 = arith.index_cast %arg1 : i32 to index
    %c14 = arith.constant 14 : index
    %103 = memref.load %arg5[%102, %c14] : memref<3x25xf32, #tpu.memory_space<smem>>
    %104 = vector.broadcast %103 : f32 to vector<10x128xf32>
    %105 = arith.mulf %104, %22 : vector<10x128xf32>
    %106 = arith.addf %101, %105 : vector<10x128xf32>
    %107 = arith.index_cast %arg1 : i32 to index
    %c15 = arith.constant 15 : index
    %108 = memref.load %arg5[%107, %c15] : memref<3x25xf32, #tpu.memory_space<smem>>
    %109 = vector.broadcast %108 : f32 to vector<10x128xf32>
    %110 = arith.mulf %109, %25 : vector<10x128xf32>
    %111 = arith.addf %106, %110 : vector<10x128xf32>
    %112 = arith.index_cast %arg1 : i32 to index
    %c16 = arith.constant 16 : index
    %113 = memref.load %arg5[%112, %c16] : memref<3x25xf32, #tpu.memory_space<smem>>
    %114 = vector.broadcast %113 : f32 to vector<10x128xf32>
    %115 = arith.mulf %114, %28 : vector<10x128xf32>
    %116 = arith.addf %111, %115 : vector<10x128xf32>
    %117 = arith.index_cast %arg1 : i32 to index
    %c17 = arith.constant 17 : index
    %118 = memref.load %arg5[%117, %c17] : memref<3x25xf32, #tpu.memory_space<smem>>
    %119 = vector.broadcast %118 : f32 to vector<10x128xf32>
    %120 = arith.mulf %119, %26 : vector<10x128xf32>
    %121 = arith.addf %116, %120 : vector<10x128xf32>
    %122 = arith.index_cast %arg1 : i32 to index
    %c18 = arith.constant 18 : index
    %123 = memref.load %arg5[%122, %c18] : memref<3x25xf32, #tpu.memory_space<smem>>
    %124 = vector.broadcast %123 : f32 to vector<10x128xf32>
    %125 = arith.mulf %124, %29 : vector<10x128xf32>
    %126 = arith.addf %121, %125 : vector<10x128xf32>
    %127 = arith.index_cast %arg1 : i32 to index
    %c19 = arith.constant 19 : index
    %128 = memref.load %arg5[%127, %c19] : memref<3x25xf32, #tpu.memory_space<smem>>
    %129 = vector.broadcast %128 : f32 to vector<10x128xf32>
    %130 = arith.mulf %129, %27 : vector<10x128xf32>
    %131 = arith.addf %126, %130 : vector<10x128xf32>
    %cst_41 = arith.constant 0.000000e+00 : f32
    %132 = vector.broadcast %cst_41 : f32 to vector<10x128xf32>
    %133 = arith.index_cast %arg1 : i32 to index
    %c20 = arith.constant 20 : index
    %134 = memref.load %arg5[%133, %c20] : memref<3x25xf32, #tpu.memory_space<smem>>
    %135 = vector.broadcast %134 : f32 to vector<10x128xf32>
    %136 = arith.mulf %135, %20 : vector<10x128xf32>
    %137 = arith.addf %132, %136 : vector<10x128xf32>
    %138 = arith.index_cast %arg1 : i32 to index
    %c21 = arith.constant 21 : index
    %139 = memref.load %arg5[%138, %c21] : memref<3x25xf32, #tpu.memory_space<smem>>
    %140 = vector.broadcast %139 : f32 to vector<10x128xf32>
    %141 = arith.mulf %140, %23 : vector<10x128xf32>
    %142 = arith.addf %137, %141 : vector<10x128xf32>
    %143 = arith.index_cast %arg1 : i32 to index
    %c22 = arith.constant 22 : index
    %144 = memref.load %arg5[%143, %c22] : memref<3x25xf32, #tpu.memory_space<smem>>
    %145 = vector.broadcast %144 : f32 to vector<10x128xf32>
    %146 = arith.mulf %145, %21 : vector<10x128xf32>
    %147 = arith.addf %142, %146 : vector<10x128xf32>
    %148 = arith.index_cast %arg1 : i32 to index
    %c23 = arith.constant 23 : index
    %149 = memref.load %arg5[%148, %c23] : memref<3x25xf32, #tpu.memory_space<smem>>
    %150 = vector.broadcast %149 : f32 to vector<10x128xf32>
    %151 = arith.mulf %150, %24 : vector<10x128xf32>
    %152 = arith.addf %147, %151 : vector<10x128xf32>
    %153 = arith.index_cast %arg1 : i32 to index
    %c24 = arith.constant 24 : index
    %154 = memref.load %arg5[%153, %c24] : memref<3x25xf32, #tpu.memory_space<smem>>
    %155 = vector.broadcast %154 : f32 to vector<10x128xf32>
    %156 = arith.mulf %155, %22 : vector<10x128xf32>
    %157 = arith.addf %152, %156 : vector<10x128xf32>
    %158 = vector.extract_strided_slice %80 {offsets = [0, 0], sizes = [8, 128], strides = [1, 1]} : vector<10x128xf32> to vector<8x128xf32>
    %159 = vector.extract_strided_slice %131 {offsets = [1, 0], sizes = [8, 128], strides = [1, 1]} : vector<10x128xf32> to vector<8x128xf32>
    %160 = arith.addf %158, %159 : vector<8x128xf32>
    %161 = vector.extract_strided_slice %157 {offsets = [2, 0], sizes = [8, 128], strides = [1, 1]} : vector<10x128xf32> to vector<8x128xf32>
    %162 = arith.addf %160, %161 : vector<8x128xf32>
    %cst_42 = arith.constant 0.000000e+00 : f32
    %163 = vector.broadcast %cst_42 : f32 to vector<8x128xf32>
    %164 = arith.cmpf ogt, %162, %163 : vector<8x128xf32>
    %cst_43 = arith.constant 0.000000e+00 : f32
    %165 = vector.broadcast %cst_43 : f32 to vector<8x128xf32>
    %166 = arith.minimumf %162, %165 : vector<8x128xf32>
    %167 = math.exp %166 : vector<8x128xf32>
    %cst_44 = arith.constant 1.000000e+00 : f32
    %168 = vector.broadcast %cst_44 : f32 to vector<8x128xf32>
    %169 = arith.subf %167, %168 : vector<8x128xf32>
    %170 = arith.select %164, %162, %169 : vector<8x128xi1>, vector<8x128xf32>
    %c0_45 = arith.constant 0 : index
    %c0_46 = arith.constant 0 : index
    %c0_47 = arith.constant 0 : index
    %c0_48 = arith.constant 0 : index
    %171 = vector.load %arg6[%c0_45, %c0_46, %c0_47, %c0_48] : memref<1x1x8x128xf32, #tpu.memory_space<vmem>>, vector<1x1x8x128xf32>
    %172 = vector.shape_cast %171 : vector<1x1x8x128xf32> to vector<8x128xf32>
    %173 = vector.shape_cast %170 : vector<8x128xf32> to vector<1x1x8x128xf32>
    tpu.vector_store %arg6[%c0_45, %c0_46, %c0_47, %c0_48], %173 {strides = array<i32>} : memref<1x1x8x128xf32, #tpu.memory_space<vmem>>, vector<1x1x8x128xf32>,
    return
  }
  func.func @transform_0(%arg0: i32, %arg1: i32, %arg2: i32) -> (i32, i32, i32, i32, i32) {
    %c0_i32 = arith.constant 0 : i32
    %c0_i32_0 = arith.constant 0 : i32
    %c0_i32_1 = arith.constant 0 : i32
    return %arg0, %arg1, %c0_i32, %arg2, %c0_i32_0 : i32, i32, i32, i32, i32
  }
  func.func @transform_1(%arg0: i32, %arg1: i32, %arg2: i32) -> (i32, i32, i32, i32, i32) {
    %c1_i32 = arith.constant 1 : i32
    %0 = arith.addi %arg2, %c1_i32 : i32
    %c1_i32_0 = arith.constant 1 : i32
    %1 = arith.muli %0, %c1_i32_0 : i32
    %c0_i32 = arith.constant 0 : i32
    %c0_i32_1 = arith.constant 0 : i32
    %c0_i32_2 = arith.constant 0 : i32
    return %arg0, %arg1, %c0_i32, %1, %c0_i32_1 : i32, i32, i32, i32, i32
  }
  func.func @transform_2(%arg0: i32, %arg1: i32, %arg2: i32) -> (i32, i32) {
    %c0_i32 = arith.constant 0 : i32
    %c0_i32_0 = arith.constant 0 : i32
    %c0_i32_1 = arith.constant 0 : i32
    return %c0_i32, %c0_i32_0 : i32, i32
  }
  func.func @transform_3(%arg0: i32, %arg1: i32, %arg2: i32) -> (i32, i32, i32, i32) {
    %c0_i32 = arith.constant 0 : i32
    %c0_i32_0 = arith.constant 0 : i32
    return %arg0, %arg1, %arg2, %c0_i32 : i32, i32, i32, i32
  }
}

</mosaic_0001>

<llo_original>
// kernel: tpu_custom_call.1
$region0: #{tpu_custom_call.1}
  #allocation0 [shape = 'u32[]', space=smem, size = 0x4, offset = 0x4, fixed_abs, tag = 'smem constant byte address 0x4 - core index']
  #allocation1 [shape = 'u32[144,128]{1,0:T(1,128)}', space=vmem, size = 0x12000, scoped, tag = 'internal scratch']
  %s0 = inlined_call_operand.hbm [shape: f32[2,3,4,16,130], index: 0, kind: input, shape index: {}]
  %s1 = inlined_call_operand.hbm [shape: f32[2,3,4,16,130], index: 1, kind: input, shape index: {}]
  %s2 = inlined_call_operand.vmem [shape: f32[3,25], index: 2, kind: input, shape index: {}]
  %s3 = inlined_call_operand.hbm [shape: f32[2,3,8,128], index: 3, kind: output, shape index: {}]
  %s4 = sld [smem:[#allocation0]]
  $region57: #{tpu_custom_call.1} parent=0
    _
  %s6 = ssub.s32 1, %s4
  %s7 = scalar_select 0, %s6, %s4
  $region1: #{tpu_custom_call.1} parent=0
    #allocation2 [shape = 'u8[65536]{0}', space=vmem, size = 0x10000, scoped, tag = 'input window, operand 0']
    #allocation3 [shape = 's32[2]{0}', space=sflag, size = 0x8, scoped, tag = 'scoped memory for tpu_custom_call.1']
    #allocation4 [shape = 's32[2]{0}', space=sflag, size = 0x8, scoped, tag = 'scoped memory for tpu_custom_call.1']
    #allocation5 [shape = 's32[2]{0}', space=sflag, size = 0x8, scoped, tag = 'scoped memory for tpu_custom_call.1']
    #allocation6 [shape = 'u8[65536]{0}', space=vmem, size = 0x10000, scoped, tag = 'input window, operand 1']
    #allocation7 [shape = 's32[2]{0}', space=sflag, size = 0x8, scoped, tag = 'scoped memory for tpu_custom_call.1']
    #allocation8 [shape = 'u8[2048]{0}', space=smem, size = 0x800, scoped, tag = 'input window, operand 2, single buffered']
    #allocation9 [shape = 'u8[8192]{0}', space=vmem, size = 0x2000, scoped, tag = 'output window, operand 0']
    %8 = vsyncpa [#allocation3], 0
    %s9 = scalar_lea.sflag [#allocation3], 1
    %10 = vsyncpa %s9, 0
    %11 = vsyncpa [#allocation7], 0
    %s12 = scalar_lea.sflag [#allocation7], 1
    %13 = vsyncpa %s12, 0
    %14 = vsyncpa [#allocation5], 0
    %15 = vsyncpa [#allocation4], 0
    %s16 = scalar_lea.sflag [#allocation4], 1
    %17 = vsyncpa %s16, 0
    loop: start=0, step=1, limit=8
    $region2: #{tpu_custom_call.1} parent=1 // loop_pre_header
      _
    $region3: #{tpu_custom_call.1} parent=1 // loop_header
      %s19 = sphi 0, %s23
      %p20 = scmp.ge.s32.totalorder %s19, 8
      %s26 = sphi 0, %s45
      %s27 = sphi 0, %s41
      %s28 = sphi 0, %s37
      %s29 = sphi 0, %s26
      %s30 = sphi 0, %s27
      %s31 = sphi 0, %s28
      %s32 = sphi 0, %s29
      %s33 = sphi 0, %s30
      %s34 = sphi 0, %s31
      %s52 = sphi 0, %s54
      %s55 = sphi 0, %s52
      %s56 = sphi 0, %s55
      %s72 = sphi 0, %s56
      %s84 = sphi 0, %s86
      %s87 = sphi 0, %s84
      %s88 = sphi 0, %s87
      %s104 = sphi 0, %s88
      %s108 = sphi 0, %s108
      %s110 = sphi 0, %s108
      %s111 = sphi 0, %s110
      %s125 = sphi 0, %s111
      %s135 = sphi 0, %s137
      %s138 = sphi 0, %s135
      %s139 = sphi 0, %s138
      %s155 = sphi 0, %s139
    $region4: #{tpu_custom_call.1} parent=1 // loop_header_branch
      %22 = sbr.rel (%p20) target = $region8
    $region5: #{tpu_custom_call.1} parent=1 // loop_body
      %s24 = ssub.s32 %s19, 1
      %s25 = ssub.s32 %s19, 2
      %s35 = sadd.s32 1, %s28
      %p36 = scmp.ge.s32.totalorder %s35, 1
      %s37 = scalar_select %p36, 0, %s35
      %s38 = sadd.s32 1, %s27
      %s39 = scalar_select %p36, %s38, %s27
      %p40 = scmp.ge.s32.totalorder %s39, 3
      %s41 = scalar_select %p40, 0, %s39
      %s42 = sadd.s32 1, %s26
      %s43 = scalar_select %p40, %s42, %s26
      %p44 = scmp.ge.s32.totalorder %s43, 2
      %s45 = scalar_select %p44, 0, %s43
      %s46 = ssub.s32 %s26, %s45
      %s47 = ssub.s32 %s27, %s41
      %s48 = sor.u32 %s46, %s47
      %s49 = ssub.s32 %s28, %s37
      %s50 = sor.u32 %s48, %s49
      %p51 = scmp.eq.s32.totalorder %s50, 0
      %s53 = sadd.s32 %s52, 1
      %s54 = scalar_select %p51, %s52, %s53
      %p57 = pneg %p51
      %p58 = scmp.eq.s32.totalorder %s19, 5
      %p59 = por %p57, %p58
      %p60 = scmp.ne.s32.totalorder %s52, %s55
      %p61 = scmp.eq.s32.totalorder %s19, 0
      %p62 = por %p60, %p61
      %p63 = scmp.ne.s32.totalorder %s52, %s55
      %p64 = scmp.eq.s32.totalorder %s24, 5
      %p65 = por %p63, %p64
      %p66 = scmp.ne.s32.totalorder %s55, %s56
      %p67 = scmp.eq.s32.totalorder %s24, 0
      %p68 = por %p66, %p67
      %p69 = scmp.ne.s32.totalorder %s55, %s56
      %p70 = scmp.eq.s32.totalorder %s25, 5
      %p71 = por %p69, %p70
      %p73 = scmp.ne.s32.totalorder %s56, %s72
      %p74 = scmp.eq.s32.totalorder %s25, 0
      %p75 = por %p73, %p74
      %s76 = sadd.s32 %s28, 1
      %s77 = sadd.s32 %s37, 1
      %s78 = ssub.s32 %s26, %s45
      %s79 = ssub.s32 %s27, %s41
      %s80 = sor.u32 %s78, %s79
      %s81 = ssub.s32 %s76, %s77
      %s82 = sor.u32 %s80, %s81
      %p83 = scmp.eq.s32.totalorder %s82, 0
      %s85 = sadd.s32 %s84, 1
      %s86 = scalar_select %p83, %s84, %s85
      %p89 = pneg %p83
      %p90 = scmp.eq.s32.totalorder %s19, 5
      %p91 = por %p89, %p90
      %p92 = scmp.ne.s32.totalorder %s84, %s87
      %p93 = scmp.eq.s32.totalorder %s19, 0
      %p94 = por %p92, %p93
      %p95 = scmp.ne.s32.totalorder %s84, %s87
      %p96 = scmp.eq.s32.totalorder %s24, 5
      %p97 = por %p95, %p96
      %p98 = scmp.ne.s32.totalorder %s87, %s88
      %p99 = scmp.eq.s32.totalorder %s24, 0
      %p100 = por %p98, %p99
      %p101 = scmp.ne.s32.totalorder %s87, %s88
      %p102 = scmp.eq.s32.totalorder %s25, 5
      %p103 = por %p101, %p102
      %p105 = scmp.ne.s32.totalorder %s88, %s104
      %p106 = scmp.eq.s32.totalorder %s25, 0
      %p107 = por %p105, %p106
      %s109 = sadd.s32 %s108, 1
      %p112 = scmp.eq.s32.totalorder %s19, 5
      %p113 = scmp.ne.s32.totalorder %s108, %s110
      %p114 = scmp.eq.s32.totalorder %s19, 0
      %p115 = por %p113, %p114
      %p116 = scmp.ne.s32.totalorder %s108, %s110
      %p117 = scmp.eq.s32.totalorder %s24, 5
      %p118 = por %p116, %p117
      %p119 = scmp.ne.s32.totalorder %s110, %s111
      %p120 = scmp.eq.s32.totalorder %s24, 0
      %p121 = por %p119, %p120
      %p122 = scmp.ne.s32.totalorder %s110, %s111
      %p123 = scmp.eq.s32.totalorder %s25, 5
      %p124 = por %p122, %p123
      %p126 = scmp.ne.s32.totalorder %s111, %s125
      %p127 = scmp.eq.s32.totalorder %s25, 0
      %p128 = por %p126, %p127
      %s129 = ssub.s32 %s26, %s45
      %s130 = ssub.s32 %s27, %s41
      %s131 = sor.u32 %s129, %s130
      %s132 = ssub.s32 %s28, %s37
      %s133 = sor.u32 %s131, %s132
      %p134 = scmp.eq.s32.totalorder %s133, 0
      %s136 = sadd.s32 %s135, 1
      %s137 = scalar_select %p134, %s135, %s136
      %p140 = pneg %p134
      %p141 = scmp.eq.s32.totalorder %s19, 5
      %p142 = por %p140, %p141
      %p143 = scmp.ne.s32.totalorder %s135, %s138
      %p144 = scmp.eq.s32.totalorder %s19, 0
      %p145 = por %p143, %p144
      %p146 = scmp.ne.s32.totalorder %s135, %s138
      %p147 = scmp.eq.s32.totalorder %s24, 5
      %p148 = por %p146, %p147
      %p149 = scmp.ne.s32.totalorder %s138, %s139
      %p150 = scmp.eq.s32.totalorder %s24, 0
      %p151 = por %p149, %p150
      %p152 = scmp.ne.s32.totalorder %s138, %s139
      %p153 = scmp.eq.s32.totalorder %s25, 5
      %p154 = por %p152, %p153
      %p156 = scmp.ne.s32.totalorder %s139, %s155
      %p157 = scmp.eq.s32.totalorder %s25, 0
      %p158 = por %p156, %p157
      %p159 = scmp.le.s32.totalorder 1, %s19
      %p160 = scmp.lt.s32.totalorder %s19, 7
      %p161 = pnand %p159, %p160
      %p162 = pneg %p161
      // Predicated region
      $region9: #{tpu_custom_call.1} parent=5 // pred_check
        _
      $region10: #{tpu_custom_call.1} parent=5 // pred_check_branch
        %164 = sbr.rel (%p161) target = $region12
      $region11: #{tpu_custom_call.1} parent=5 // pred_region
        %s165 = ssub.s32 %s19, 1
        // Predicated region
        $region13: #{tpu_custom_call.1} parent=11 // pred_check
          %p166 = pneg %p121
        $region14: #{tpu_custom_call.1} parent=11 // pred_check_branch
          %168 = sbr.rel (%p166) target = $region16
        $region15: #{tpu_custom_call.1} parent=11 // pred_region
          %s170 = ssub.s32 64, 64
          %171 = vsyncadd [#allocation5], %s170
          %s173 = sshll.u32 %s2, 4
          %s174 = int_to_ptr.vmem [resolvable:$true] %s173
          %176 = dma.vmem_to_smem %s174, 64, [#allocation8], [#allocation5]
        $region16: #{tpu_custom_call.1} parent=11 // pred_fallthru
          _
      $region12: #{tpu_custom_call.1} parent=5 // pred_fallthru
        _
      %p177 = scmp.lt.s32.totalorder %s19, 6
      // Predicated region
      $region17: #{tpu_custom_call.1} parent=5 // pred_check
        %p178 = pneg %p177
      $region18: #{tpu_custom_call.1} parent=5 // pred_check_branch
        %180 = sbr.rel (%p178) target = $region20
      $region19: #{tpu_custom_call.1} parent=5 // pred_region
        // Predicated region
        $region21: #{tpu_custom_call.1} parent=19 // pred_check
          %p181 = pneg %p62
        $region22: #{tpu_custom_call.1} parent=19 // pred_check_branch
          %183 = sbr.rel (%p181) target = $region24
        $region23: #{tpu_custom_call.1} parent=19 // pred_region
          %s184 = sand.u32 %s52, 1
          %s185 = scalar_lea.sflag [#allocation3], %s184
          %s186 = sand.u32 %s52, 1
          %s187 = smul.addr %s186, 64
          %s188 = scalar_lea.vmem [#allocation2], %s187
          %s190 = ssub.s32 1024, 1024
          %191 = vsyncadd %s185, %s190
          %s192 = smul.addr %s28, 2
          %s193 = smul.addr %s27, 16
          %s194 = sadd.s32 %s192, %s193
          %s195 = smul.addr %s26, 48
          %s196 = sadd.s32 %s194, %s195
          %s197 = smul.addr %s196, 128
          %s198 = scalar_lea.hbm %s0, %s197
          %s199 = sshll.u32 %s188, 4
          %s200 = int_to_ptr.vmem [resolvable:$true] %s199
          %205 = dma.hbm_to_vmem [thread:$0]  %s198, 1024, %s200, %s185, 512, 256, 16
        $region24: #{tpu_custom_call.1} parent=19 // pred_fallthru
          _
        // Predicated region
        $region25: #{tpu_custom_call.1} parent=19 // pred_check
          %p206 = pneg %p94
        $region26: #{tpu_custom_call.1} parent=19 // pred_check_branch
          %208 = sbr.rel (%p206) target = $region28
        $region27: #{tpu_custom_call.1} parent=19 // pred_region
          %s209 = sand.u32 %s84, 1
          %s210 = scalar_lea.sflag [#allocation7], %s209
          %s211 = sand.u32 %s84, 1
          %s212 = smul.addr %s211, 64
          %s213 = scalar_lea.vmem [#allocation6], %s212
          %s214 = sadd.s32 %s28, 1
          %s216 = ssub.s32 1024, 1024
          %217 = vsyncadd %s210, %s216
          %s218 = smul.addr %s214, 2
          %s219 = smul.addr %s27, 16
          %s220 = sadd.s32 %s218, %s219
          %s221 = smul.addr %s26, 48
          %s222 = sadd.s32 %s220, %s221
          %s223 = smul.addr %s222, 128
          %s224 = scalar_lea.hbm %s1, %s223
          %s225 = sshll.u32 %s213, 4
          %s226 = int_to_ptr.vmem [resolvable:$true] %s225
          %231 = dma.hbm_to_vmem [thread:$0]  %s224, 1024, %s226, %s210, 512, 256, 16
        $region28: #{tpu_custom_call.1} parent=19 // pred_fallthru
          _
      $region20: #{tpu_custom_call.1} parent=5 // pred_fallthru
        _
      %p232 = scmp.le.s32.totalorder 1, %s19
      %p233 = scmp.lt.s32.totalorder %s19, 7
      %p234 = pnand %p232, %p233
      %p235 = pneg %p234
      // Predicated region
      $region29: #{tpu_custom_call.1} parent=5 // pred_check
        _
      $region30: #{tpu_custom_call.1} parent=5 // pred_check_branch
        %237 = sbr.rel (%p234) target = $region32
      $region31: #{tpu_custom_call.1} parent=5 // pred_region
        %s238 = ssub.s32 %s19, 1
        %s239 = sand.u32 %s55, 1
        %s240 = scalar_lea.sflag [#allocation3], %s239
        %s241 = sand.u32 %s55, 1
        %s242 = smul.addr %s241, 64
        %s243 = scalar_lea.vmem [#allocation2], %s242
        // Predicated region
        $region33: #{tpu_custom_call.1} parent=31 // pred_check
          %p244 = pneg %p68
        $region34: #{tpu_custom_call.1} parent=31 // pred_check_branch
          %246 = sbr.rel (%p244) target = $region36
        $region35: #{tpu_custom_call.1} parent=31 // pred_region
          %247 = dma.done %s240, 1024
        $region36: #{tpu_custom_call.1} parent=31 // pred_fallthru
          _
        %s248 = sand.u32 %s87, 1
        %s249 = scalar_lea.sflag [#allocation7], %s248
        %s250 = sand.u32 %s87, 1
        %s251 = smul.addr %s250, 64
        %s252 = scalar_lea.vmem [#allocation6], %s251
        // Predicated region
        $region37: #{tpu_custom_call.1} parent=31 // pred_check
          %p253 = pneg %p100
        $region38: #{tpu_custom_call.1} parent=31 // pred_check_branch
          %255 = sbr.rel (%p253) target = $region40
        $region39: #{tpu_custom_call.1} parent=31 // pred_region
          %256 = dma.done %s249, 1024
        $region40: #{tpu_custom_call.1} parent=31 // pred_fallthru
          _
        // Predicated region
        $region41: #{tpu_custom_call.1} parent=31 // pred_check
          %p257 = pneg %p121
        $region42: #{tpu_custom_call.1} parent=31 // pred_check_branch
          %259 = sbr.rel (%p257) target = $region44
        $region43: #{tpu_custom_call.1} parent=31 // pred_region
          %260 = dma.done [#allocation5], 64
        $region44: #{tpu_custom_call.1} parent=31 // pred_fallthru
          _
        %261 = sfence
        %s262 = sand.u32 %s55, 1
        %s263 = scalar_lea.sflag [#allocation3], %s262
        %s264 = sand.u32 %s55, 1
        %s265 = smul.addr %s264, 64
        %s266 = scalar_lea.vmem [#allocation2], %s265
        %p267 = pneg %p68
        %p268 = pneg %p65
        %s269 = sand.u32 %s87, 1
        %s270 = scalar_lea.sflag [#allocation7], %s269
        %s271 = sand.u32 %s87, 1
        %s272 = smul.addr %s271, 64
        %s273 = scalar_lea.vmem [#allocation6], %s272
        %p274 = pneg %p100
        %p275 = pneg %p97
        %p276 = pneg %p121
        %p277 = pneg %p118
        %p278 = pneg %p151
        %p279 = pneg %p148
        %s280 = sand.u32 %s138, 1
        %s281 = scalar_lea.sflag [#allocation4], %s280
        %s282 = sand.u32 %s138, 1
        %s283 = smul.addr %s282, 8
        %s284 = scalar_lea.vmem [#allocation9], %s283
        %s285 = sadd.s32 %s31, 1
        %v286 = vld [vmem:[%s243] sm:$0xff]
        %v287 = vld [vmem:[%s243 + $0x8] sm:$0xff]
        %v288 = vld [vmem:[%s252] sm:$0x3]
        %v289 = vld [vmem:[%s252 + $0x8] sm:$0x3]
        %s290 = scalar_lea.vmem %s243, 16 [#allocation2]
        %v291 = vld [vmem:[%s290] sm:$0xff]
        %v292 = vld [vmem:[%s290 + $0x8] sm:$0xff]
        %s293 = scalar_lea.vmem %s252, 16 [#allocation6]
        %v294 = vld [vmem:[%s293] sm:$0x3]
        %v295 = vld [vmem:[%s293 + $0x8] sm:$0x3]
        %s296 = scalar_lea.vmem %s243, 32 [#allocation2]
        %v297 = vld [vmem:[%s296] sm:$0xff]
        %v298 = vld [vmem:[%s296 + $0x8] sm:$0xff]
        %s299 = scalar_lea.vmem %s252, 32 [#allocation6]
        %v300 = vld [vmem:[%s299] sm:$0x3]
        %v301 = vld [vmem:[%s299 + $0x8] sm:$0x3]
        %s302 = scalar_lea.vmem %s243, 48 [#allocation2]
        %v303 = vld [vmem:[%s302] sm:$0xff]
        %v304 = vld [vmem:[%s302 + $0x8] sm:$0xff]
        %s305 = scalar_lea.vmem %s252, 48 [#allocation6]
        %v306 = vld [vmem:[%s305] sm:$0x3]
        %v307 = vld [vmem:[%s305 + $0x8] sm:$0x3]
        %s308 = smul.u32 %s30, 128
        %s309 = sld [smem:[#allocation8 + %s308]]
        %v310 = vstv %s309
        %v311 = vmul.f32 %v310, %v286
        %v312 = vadd.f32 %v311, 0.0
        %s313 = sadd.s32 %s308, 1
        %s314 = sld [smem:[#allocation8 + %s313]]
        %v315 = vstv %s314
        %v316 = vmul.f32 %v315, %v291
        %v317 = vadd.f32 %v312, %v316
        %s318 = sadd.s32 %s308, 2
        %s319 = sld [smem:[#allocation8 + %s318]]
        %v320 = vstv %s319
        %v321 = vmul.f32 %v320, %v286
        %v322 = vmul.f32 %v320, %v287
        %325 = vrot.lane.b32.xlu0 %v321, 127
        %v326 = vpop.permute.xlu0 %325
        %327 = vrot.lane.b32.xlu0 %v322, 127
        %v328 = vpop.permute.xlu0 %327
        %vm329 = vcmask 1039360
        %v330 = vsel %vm329, %v326, %v328
        %v332 = vadd.f32 %v317, %v330
        %s333 = sadd.s32 %s308, 3
        %s334 = sld [smem:[#allocation8 + %s333]]
        %v335 = vstv %s334
        %v336 = vmul.f32 %v335, %v291
        %v337 = vmul.f32 %v335, %v292
        %340 = vrot.lane.b32.xlu0 %v336, 127
        %v341 = vpop.permute.xlu0 %340
        %342 = vrot.lane.b32.xlu0 %v337, 127
        %v343 = vpop.permute.xlu0 %342
        %v344 = vsel %vm329, %v341, %v343
        %v346 = vadd.f32 %v332, %v344
        %s347 = sadd.s32 %s308, 4
        %s348 = sld [smem:[#allocation8 + %s347]]
        %v349 = vstv %s348
        %v350 = vmul.f32 %v349, %v286
        %v351 = vmul.f32 %v349, %v287
        %354 = vrot.lane.b32.xlu0 %v350, 126
        %v355 = vpop.permute.xlu0 %354
        %356 = vrot.lane.b32.xlu0 %v351, 126
        %v357 = vpop.permute.xlu0 %356
        %vm358 = vcmask 1031168
        %v359 = vsel %vm358, %v355, %v357
        %v361 = vadd.f32 %v346, %v359
        %s362 = sadd.s32 %s308, 5
        %s363 = sld [smem:[#allocation8 + %s362]]
        %v364 = vstv %s363
        %v365 = vmul.f32 %v364, %v297
        %v366 = vadd.f32 %v361, %v365
        %s367 = sadd.s32 %s308, 6
        %s368 = sld [smem:[#allocation8 + %s367]]
        %v369 = vstv %s368
        %v370 = vmul.f32 %v369, %v303
        %v371 = vadd.f32 %v366, %v370
        %s372 = sadd.s32 %s308, 7
        %s373 = sld [smem:[#allocation8 + %s372]]
        %v374 = vstv %s373
        %v375 = vmul.f32 %v374, %v297
        %v376 = vmul.f32 %v374, %v298
        %379 = vrot.lane.b32.xlu0 %v375, 127
        %v380 = vpop.permute.xlu0 %379
        %381 = vrot.lane.b32.xlu0 %v376, 127
        %v382 = vpop.permute.xlu0 %381
        %v383 = vsel %vm329, %v380, %v382
        %v385 = vadd.f32 %v371, %v383
        %s386 = sadd.s32 %s308, 8
        %s387 = sld [smem:[#allocation8 + %s386]]
        %v388 = vstv %s387
        %v389 = vmul.f32 %v388, %v303
        %v390 = vmul.f32 %v388, %v304
        %393 = vrot.lane.b32.xlu0 %v389, 127
        %v394 = vpop.permute.xlu0 %393
        %395 = vrot.lane.b32.xlu0 %v390, 127
        %v396 = vpop.permute.xlu0 %395
        %v397 = vsel %vm329, %v394, %v396
        %v399 = vadd.f32 %v385, %v397
        %s400 = sadd.s32 %s308, 9
        %s401 = sld [smem:[#allocation8 + %s400]]
        %v402 = vstv %s401
        %v403 = vmul.f32 %v402, %v297
        %v404 = vmul.f32 %v402, %v298
        %407 = vrot.lane.b32.xlu0 %v403, 126
        %v408 = vpop.permute.xlu0 %407
        %409 = vrot.lane.b32.xlu0 %v404, 126
        %v410 = vpop.permute.xlu0 %409
        %v411 = vsel %vm358, %v408, %v410
        %v413 = vadd.f32 %v399, %v411
        %s414 = sadd.s32 %s308, 10
        %s415 = sld [smem:[#allocation8 + %s414]]
        %v416 = vstv %s415
        %v417 = vmul.f32 %v416, %v286
        %v418 = vmul.f32 %v416, %v288
        %v419 = vadd.f32 %v417, 0.0
        %v420 = vadd.f32 %v418, 0.0
        %s421 = sadd.s32 %s308, 11
        %s422 = sld [smem:[#allocation8 + %s421]]
        %v423 = vstv %s422
        %v424 = vmul.f32 %v423, %v291
        %v425 = vmul.f32 %v423, %v294
        %v426 = vadd.f32 %v419, %v424
        %v427 = vadd.f32 %v420, %v425
        %s428 = sadd.s32 %s308, 12
        %s429 = sld [smem:[#allocation8 + %s428]]
        %v430 = vstv %s429
        %v431 = vmul.f32 %v430, %v286
        %v432 = vmul.f32 %v430, %v287
        %v433 = vmul.f32 %v430, %v288
        %v434 = vmul.f32 %v430, %v289
        %439 = vrot.lane.b32.xlu0 %v431, 127
        %v440 = vpop.permute.xlu0 %439
        %441 = vrot.lane.b32.xlu0 %v432, 127
        %v442 = vpop.permute.xlu0 %441
        %443 = vrot.lane.b32.xlu0 %v433, 127
        %v444 = vpop.permute.xlu0 %443
        %445 = vrot.lane.b32.xlu0 %v434, 127
        %v446 = vpop.permute.xlu0 %445
        %v447 = vsel %vm329, %v440, %v442
        %v448 = vsel %vm329, %v444, %v446
        %v451 = vadd.f32 %v426, %v447
        %v452 = vadd.f32 %v427, %v448
        %s453 = sadd.s32 %s308, 13
        %s454 = sld [smem:[#allocation8 + %s453]]
        %v455 = vstv %s454
        %v456 = vmul.f32 %v455, %v291
        %v457 = vmul.f32 %v455, %v292
        %v458 = vmul.f32 %v455, %v294
        %v459 = vmul.f32 %v455, %v295
        %464 = vrot.lane.b32.xlu0 %v456, 127
        %v465 = vpop.permute.xlu0 %464
        %466 = vrot.lane.b32.xlu0 %v457, 127
        %v467 = vpop.permute.xlu0 %466
        %468 = vrot.lane.b32.xlu0 %v458, 127
        %v469 = vpop.permute.xlu0 %468
        %470 = vrot.lane.b32.xlu0 %v459, 127
        %v471 = vpop.permute.xlu0 %470
        %v472 = vsel %vm329, %v465, %v467
        %v473 = vsel %vm329, %v469, %v471
        %v476 = vadd.f32 %v451, %v472
        %v477 = vadd.f32 %v452, %v473
        %s478 = sadd.s32 %s308, 14
        %s479 = sld [smem:[#allocation8 + %s478]]
        %v480 = vstv %s479
        %v481 = vmul.f32 %v480, %v286
        %v482 = vmul.f32 %v480, %v287
        %v483 = vmul.f32 %v480, %v288
        %v484 = vmul.f32 %v480, %v289
        %489 = vrot.lane.b32.xlu0 %v481, 126
        %v490 = vpop.permute.xlu0 %489
        %491 = vrot.lane.b32.xlu0 %v482, 126
        %v492 = vpop.permute.xlu0 %491
        %493 = vrot.lane.b32.xlu0 %v483, 126
        %v494 = vpop.permute.xlu0 %493
        %495 = vrot.lane.b32.xlu0 %v484, 126
        %v496 = vpop.permute.xlu0 %495
        %v497 = vsel %vm358, %v490, %v492
        %v498 = vsel %vm358, %v494, %v496
        %v501 = vadd.f32 %v476, %v497
        %v502 = vadd.f32 %v477, %v498
        %s503 = sadd.s32 %s308, 15
        %s504 = sld [smem:[#allocation8 + %s503]]
        %v505 = vstv %s504
        %v506 = vmul.f32 %v505, %v297
        %v507 = vmul.f32 %v505, %v300
        %v508 = vadd.f32 %v501, %v506
        %v509 = vadd.f32 %v502, %v507
        %s510 = sadd.s32 %s308, 16
        %s511 = sld [smem:[#allocation8 + %s510]]
        %v512 = vstv %s511
        %v513 = vmul.f32 %v512, %v303
        %v514 = vmul.f32 %v512, %v306
        %v515 = vadd.f32 %v508, %v513
        %v516 = vadd.f32 %v509, %v514
        %s517 = sadd.s32 %s308, 17
        %s518 = sld [smem:[#allocation8 + %s517]]
        %v519 = vstv %s518
        %v520 = vmul.f32 %v519, %v297
        %v521 = vmul.f32 %v519, %v298
        %v522 = vmul.f32 %v519, %v300
        %v523 = vmul.f32 %v519, %v301
        %528 = vrot.lane.b32.xlu0 %v520, 127
        %v529 = vpop.permute.xlu0 %528
        %530 = vrot.lane.b32.xlu0 %v521, 127
        %v531 = vpop.permute.xlu0 %530
        %532 = vrot.lane.b32.xlu0 %v522, 127
        %v533 = vpop.permute.xlu0 %532
        %534 = vrot.lane.b32.xlu0 %v523, 127
        %v535 = vpop.permute.xlu0 %534
        %v536 = vsel %vm329, %v529, %v531
        %v537 = vsel %vm329, %v533, %v535
        %v540 = vadd.f32 %v515, %v536
        %v541 = vadd.f32 %v516, %v537
        %s542 = sadd.s32 %s308, 18
        %s543 = sld [smem:[#allocation8 + %s542]]
        %v544 = vstv %s543
        %v545 = vmul.f32 %v544, %v303
        %v546 = vmul.f32 %v544, %v304
        %v547 = vmul.f32 %v544, %v306
        %v548 = vmul.f32 %v544, %v307
        %553 = vrot.lane.b32.xlu0 %v545, 127
        %v554 = vpop.permute.xlu0 %553
        %555 = vrot.lane.b32.xlu0 %v546, 127
        %v556 = vpop.permute.xlu0 %555
        %557 = vrot.lane.b32.xlu0 %v547, 127
        %v558 = vpop.permute.xlu0 %557
        %559 = vrot.lane.b32.xlu0 %v548, 127
        %v560 = vpop.permute.xlu0 %559
        %v561 = vsel %vm329, %v554, %v556
        %v562 = vsel %vm329, %v558, %v560
        %v565 = vadd.f32 %v540, %v561
        %v566 = vadd.f32 %v541, %v562
        %s567 = sadd.s32 %s308, 19
        %s568 = sld [smem:[#allocation8 + %s567]]
        %v569 = vstv %s568
        %v570 = vmul.f32 %v569, %v297
        %v571 = vmul.f32 %v569, %v298
        %v572 = vmul.f32 %v569, %v300
        %v573 = vmul.f32 %v569, %v301
        %578 = vrot.lane.b32.xlu0 %v570, 126
        %v579 = vpop.permute.xlu0 %578
        %580 = vrot.lane.b32.xlu0 %v571, 126
        %v581 = vpop.permute.xlu0 %580
        %582 = vrot.lane.b32.xlu0 %v572, 126
        %v583 = vpop.permute.xlu0 %582
        %584 = vrot.lane.b32.xlu0 %v573, 126
        %v585 = vpop.permute.xlu0 %584
        %v586 = vsel %vm358, %v579, %v581
        %v587 = vsel %vm358, %v583, %v585
        %v590 = vadd.f32 %v565, %v586
        %v591 = vadd.f32 %v566, %v587
        %s592 = sadd.s32 %s308, 20
        %s593 = sld [smem:[#allocation8 + %s592]]
        %v594 = vstv %s593
        %v595 = vmul.f32 %v594, %v286
        %v596 = vmul.f32 %v594, %v288
        %v597 = vadd.f32 %v595, 0.0
        %v598 = vadd.f32 %v596, 0.0
        %s599 = sadd.s32 %s308, 21
        %s600 = sld [smem:[#allocation8 + %s599]]
        %v601 = vstv %s600
        %v602 = vmul.f32 %v601, %v291
        %v603 = vmul.f32 %v601, %v294
        %v604 = vadd.f32 %v597, %v602
        %v605 = vadd.f32 %v598, %v603
        %s606 = sadd.s32 %s308, 22
        %s607 = sld [smem:[#allocation8 + %s606]]
        %v608 = vstv %s607
        %v609 = vmul.f32 %v608, %v286
        %v610 = vmul.f32 %v608, %v287
        %v611 = vmul.f32 %v608, %v288
        %v612 = vmul.f32 %v608, %v289
        %617 = vrot.lane.b32.xlu0 %v609, 127
        %v618 = vpop.permute.xlu0 %617
        %619 = vrot.lane.b32.xlu0 %v610, 127
        %v620 = vpop.permute.xlu0 %619
        %621 = vrot.lane.b32.xlu0 %v611, 127
        %v622 = vpop.permute.xlu0 %621
        %623 = vrot.lane.b32.xlu0 %v612, 127
        %v624 = vpop.permute.xlu0 %623
        %v625 = vsel %vm329, %v618, %v620
        %v626 = vsel %vm329, %v622, %v624
        %v629 = vadd.f32 %v604, %v625
        %v630 = vadd.f32 %v605, %v626
        %s631 = sadd.s32 %s308, 23
        %s632 = sld [smem:[#allocation8 + %s631]]
        %v633 = vstv %s632
        %v634 = vmul.f32 %v633, %v291
        %v635 = vmul.f32 %v633, %v292
        %v636 = vmul.f32 %v633, %v294
        %v637 = vmul.f32 %v633, %v295
        %642 = vrot.lane.b32.xlu0 %v634, 127
        %v643 = vpop.permute.xlu0 %642
        %644 = vrot.lane.b32.xlu0 %v635, 127
        %v645 = vpop.permute.xlu0 %644
        %646 = vrot.lane.b32.xlu0 %v636, 127
        %v647 = vpop.permute.xlu0 %646
        %648 = vrot.lane.b32.xlu0 %v637, 127
        %v649 = vpop.permute.xlu0 %648
        %v650 = vsel %vm329, %v643, %v645
        %v651 = vsel %vm329, %v647, %v649
        %v654 = vadd.f32 %v629, %v650
        %v655 = vadd.f32 %v630, %v651
        %s656 = sadd.s32 %s308, 24
        %s657 = sld [smem:[#allocation8 + %s656]]
        %v658 = vstv %s657
        %v659 = vmul.f32 %v658, %v286
        %v660 = vmul.f32 %v658, %v287
        %v661 = vmul.f32 %v658, %v288
        %v662 = vmul.f32 %v658, %v289
        %667 = vrot.lane.b32.xlu0 %v659, 126
        %v668 = vpop.permute.xlu0 %667
        %669 = vrot.lane.b32.xlu0 %v660, 126
        %v670 = vpop.permute.xlu0 %669
        %671 = vrot.lane.b32.xlu0 %v661, 126
        %v672 = vpop.permute.xlu0 %671
        %673 = vrot.lane.b32.xlu0 %v662, 126
        %v674 = vpop.permute.xlu0 %673
        %v675 = vsel %vm358, %v668, %v670
        %v676 = vsel %vm358, %v672, %v674
        %v679 = vadd.f32 %v654, %v675
        %v680 = vadd.f32 %v655, %v676
        %vm683 = vcmask 1046528
        %v684 = vrot.slane %v590, 1
        %v685 = vrot.slane %v591, 1
        %v686 = vsel %vm683, %v684, %v685
        %v688 = vadd.f32 %v413, %v686
        %vm691 = vcmask 1045504
        %v692 = vrot.slane %v679, 2
        %v693 = vrot.slane %v680, 2
        %v694 = vsel %vm691, %v692, %v693
        %v696 = vadd.f32 %v688, %v694
        %vm697 = vcmp.gt.f32.partialorder %v696, 0.0
        %v698 = vmin.f32 %v696, 0.0
        %v699 = vmul.f32 %v698, 1.442695
        %v700 = vpow.pop %v699
        %v701 = vsub.f32 %v700, 1.0
        %v702 = vsel %vm697, %v696, %v701
        %703 = vst [vmem:[%s284] sm:$0xff] %v702
        %s704 = sand.u32 %s138, 1
        %s705 = scalar_lea.sflag [#allocation4], %s704
        %s706 = sand.u32 %s138, 1
        %s707 = smul.addr %s706, 8
        %s708 = scalar_lea.vmem [#allocation9], %s707
        // Predicated region
        $region45: #{tpu_custom_call.1} parent=31 // pred_check
          %p709 = pneg %p148
        $region46: #{tpu_custom_call.1} parent=31 // pred_check_branch
          %711 = sbr.rel (%p709) target = $region48
        $region47: #{tpu_custom_call.1} parent=31 // pred_region
          %s713 = ssub.s32 128, 128
          %714 = vsyncadd %s705, %s713
          %s715 = sadd.s32 %s31, %s30
          %s716 = smul.addr %s29, 3
          %s717 = sadd.s32 %s715, %s716
          %s718 = smul.addr %s717, 128
          %s719 = scalar_lea.hbm %s3, %s718
          %s721 = sshll.u32 %s708, 4
          %s722 = int_to_ptr.vmem [resolvable:$true] %s721
          %724 = dma.vmem_to_hbm [thread:$0]  %s722, 128, %s719, %s705
        $region48: #{tpu_custom_call.1} parent=31 // pred_fallthru
          _
      $region32: #{tpu_custom_call.1} parent=5 // pred_fallthru
        _
      %p725 = scmp.le.s32.totalorder 2, %s19
      // Predicated region
      $region49: #{tpu_custom_call.1} parent=5 // pred_check
        %p726 = pneg %p725
      $region50: #{tpu_custom_call.1} parent=5 // pred_check_branch
        %728 = sbr.rel (%p726) target = $region52
      $region51: #{tpu_custom_call.1} parent=5 // pred_region
        %s729 = ssub.s32 %s19, 2
        // Predicated region
        $region53: #{tpu_custom_call.1} parent=51 // pred_check
          %p730 = pneg %p154
        $region54: #{tpu_custom_call.1} parent=51 // pred_check_branch
          %732 = sbr.rel (%p730) target = $region56
        $region55: #{tpu_custom_call.1} parent=51 // pred_region
          %s733 = sand.u32 %s139, 1
          %s734 = scalar_lea.sflag [#allocation4], %s733
          %s735 = sand.u32 %s139, 1
          %s736 = smul.addr %s735, 8
          %s737 = scalar_lea.vmem [#allocation9], %s736
          %738 = dma.done %s734, 128
        $region56: #{tpu_custom_call.1} parent=51 // pred_fallthru
          _
      $region52: #{tpu_custom_call.1} parent=5 // pred_fallthru
        _
    $region6: #{tpu_custom_call.1} parent=1 // loop_footer
      %s23 = sadd.s32 1, %s19
    $region7: #{tpu_custom_call.1} parent=1 // loop_footer_branch
      %18 = sbr.rel target = $region3
    $region8: #{tpu_custom_call.1} parent=1 // loop_exit
      _
    %739 = vsyncpa [#allocation3], 1
    %s740 = scalar_lea.sflag [#allocation3], 1
    %741 = vsyncpa %s740, 1
    %742 = vsyncpa [#allocation7], 1
    %s743 = scalar_lea.sflag [#allocation7], 1
    %744 = vsyncpa %s743, 1
    %745 = vsyncpa [#allocation4], 1
    %s746 = scalar_lea.sflag [#allocation4], 1
    %747 = vsyncpa %s746, 1
    %748 = vsyncpa [#allocation5], 1
    %s749 = scalar_lea.sflag [#allocation5], 1
    %750 = vsyncpa %s749, 1

</llo_original>
